<compile_context>
chip_gen: v5e
topology: v5e:2x2
jax: 0.10.0
libtpu: 0.0.40
codegen_flags: <defaults>
</compile_context>

<pallas_src>
import functools

import jax
import jax.numpy as jnp
from jax.experimental import pallas as pl
from jax.experimental.pallas import tpu as pltpu

_LANES = 128
# Multiple of 32 -> full native vreg tiles for u8/bf16/f32 alike.
# 4096 x 128 uint8 = 512 KiB per block; input + output double-buffered
# ~= 2 MiB VMEM, comfortably inside the 16 MiB scoped default on v5e
# (32 MiB on v6e/v7x), and large images still give a multi-step "parallel"
# grid so both v7x TensorCores get work.
_MAX_TILE_ROWS = 4096


def _posterize_kernel(x_ref, o_ref, *, mask: int):
    # Widen to i32 for the bitwise op (most portable across TPU generations),
    # then narrow back to uint8 for the store. `mask` is a Python int, so it
    # folds into a VPU immediate — no captured device constants.
    x = x_ref[...].astype(jnp.int32)
    o_ref[...] = jnp.bitwise_and(x, mask).astype(o_ref.dtype)


def posterize(image: jax.Array, bits: int) -> jax.Array:
    """Pallas-TPU posterize. `image` must be uint8 in [..., C, H, W]; same shape/dtype out."""
    if image.dtype != jnp.uint8:
        # TODO(synk): torchvision posterize is defined for uint8 tensors only.
        raise TypeError(f"posterize expects a uint8 image, got {image.dtype}")
    if not (0 <= bits <= 8):
        raise ValueError(f"bits must be in [0, 8], got {bits}")

    mask = (0xFF >> (8 - bits)) << (8 - bits)

    orig_shape = image.shape
    flat = image.reshape(-1)
    n = flat.shape[0]

    # Fast path: most NCHW images already have n % 128 == 0, so we reshape
    # directly to a lane-dense slab with zero extra HBM copies. The pad/slice
    # path is kept only as a fallback.
    pad = (-n) % _LANES
    if pad:
        flat = jnp.pad(flat, (0, pad))
    x2d = flat.reshape(-1, _LANES)
    rows = x2d.shape[0]

    if rows <= _MAX_TILE_ROWS:
        tile_rows = rows            # single block == full array shape (always legal)
    else:
        tile_rows = _MAX_TILE_ROWS  # big blocks; partial last block is masked by Pallas
    grid = (pl.cdiv(rows, tile_rows),)

    kernel = functools.partial(_posterize_kernel, mask=mask)

    out2d = pl.pallas_call(
        kernel,
        grid=grid,
        in_specs=[pl.BlockSpec((tile_rows, _LANES), lambda i: (i, 0))],
        out_specs=pl.BlockSpec((tile_rows, _LANES), lambda i: (i, 0)),
        out_shape=jax.ShapeDtypeStruct((rows, _LANES), jnp.uint8),
        compiler_params=pltpu.CompilerParams(
            dimension_semantics=("parallel",),
        ),
    )(x2d)

    if pad:
        return out2d.reshape(-1)[:n].reshape(orig_shape)
    return out2d.reshape(orig_shape)


class Posterize:
    """Mirror of the PyTorch Posterize nn.Module (no trainable parameters)."""

    def __init__(self, bits: int):
        self.bits = bits

    def __call__(self, image: jax.Array) -> jax.Array:
        return posterize(image, self.bits)


if __name__ == "__main__":
    key = jax.random.PRNGKey(0)
    # [N, C, H, W] uint8 RGB image
    x = jax.random.randint(key, (2, 3, 16, 16), 0, 256, dtype=jnp.int32).astype(jnp.uint8)

    bits = 3
    mod = Posterize(bits)
    y = jax.block_until_ready(mod(x))

    # Reference: torchvision posterize on uint8 tensors is `img & mask`.
    mask = (0xFF >> (8 - bits)) << (8 - bits)
    y_ref = jnp.bitwise_and(x, jnp.uint8(mask))
    assert y.shape == x.shape and y.dtype == x.dtype
    assert bool(jnp.all(y == y_ref)), "mismatch vs reference"

    print("KERNEL_OK")
</pallas_src>

<mosaic_0001>
module attributes {stable_mosaic.version = 11 : i64} {
  func.func @_posterize_kernel(%arg0: i32, %arg1: memref<12x128xi8, #tpu.memory_space<vmem>>, %arg2: memref<12x128xi8, #tpu.memory_space<vmem>>) attributes {dimension_semantics = [#tpu.dimension_semantics<parallel>], iteration_bounds = array<i64: 1>, scalar_prefetch = 0 : i64, scratch_operands = 0 : i64, tpu.core_type = #tpu.core_type<tc>, window_params = [{transform_indices = @transform_0, window_bounds = array<i64: 12, 128>}, {transform_indices = @transform_1, window_bounds = array<i64: 12, 128>}]} {
    %c0 = arith.constant 0 : index
    %c0_0 = arith.constant 0 : index
    %0 = vector.load %arg1[%c0, %c0_0] : memref<12x128xi8, #tpu.memory_space<vmem>>, vector<12x128xi8>
    %1 = arith.extui %0 : vector<12x128xi8> to vector<12x128xi32>
    %c224_i32 = arith.constant 224 : i32
    %2 = vector.broadcast %c224_i32 : i32 to vector<12x128xi32>
    %3 = arith.andi %1, %2 : vector<12x128xi32>
    %4 = arith.trunci %3 : vector<12x128xi32> to vector<12x128xi8>
    %c0_1 = arith.constant 0 : index
    %c0_2 = arith.constant 0 : index
    %5 = vector.load %arg2[%c0_1, %c0_2] : memref<12x128xi8, #tpu.memory_space<vmem>>, vector<12x128xi8>
    tpu.vector_store %arg2[%c0_1, %c0_2], %4 {strides = array<i32>} : memref<12x128xi8, #tpu.memory_space<vmem>>, vector<12x128xi8>,
    return
  }
  func.func @transform_0(%arg0: i32) -> (i32, i32) {
    %c0_i32 = arith.constant 0 : i32
    %c0_i32_0 = arith.constant 0 : i32
    return %arg0, %c0_i32 : i32, i32
  }
  func.func @transform_1(%arg0: i32) -> (i32, i32) {
    %c0_i32 = arith.constant 0 : i32
    %c0_i32_0 = arith.constant 0 : i32
    return %arg0, %c0_i32 : i32, i32
  }
}

</mosaic_0001>

<llo_original>
// kernel: tpu_custom_call.1
$region0: #{tpu_custom_call.1}
  #allocation0 [shape = 'u32[]', space=smem, size = 0x4, offset = 0x4, fixed_abs, tag = 'smem constant byte address 0x4 - core index']
  #allocation1 [shape = 'u32[72,128]{1,0:T(1,128)}', space=vmem, size = 0x9000, scoped, tag = 'internal scratch']
  %s0 = inlined_call_operand.hbm [shape: u8[12,128], index: 0, kind: input, shape index: {}]
  %s1 = inlined_call_operand.hbm [shape: u8[12,128], index: 1, kind: output, shape index: {}]
  %s2 = sld [smem:[#allocation0]]
  $region18: #{tpu_custom_call.1} parent=0
    _
  %s4 = ssub.s32 1, %s2
  %s5 = scalar_select 0, %s4, %s2
  $region1: #{tpu_custom_call.1} parent=0
    #allocation2 [shape = 'u8[2048]{0}', space=vmem, size = 0x800, scoped, tag = 'input window, operand 0, single buffered']
    #allocation3 [shape = 's32[1]{0}', space=sflag, size = 0x4, scoped, tag = 'scoped memory for tpu_custom_call.1']
    #allocation4 [shape = 's32[1]{0}', space=sflag, size = 0x4, scoped, tag = 'scoped memory for tpu_custom_call.1']
    #allocation5 [shape = 'u8[2048]{0}', space=vmem, size = 0x800, scoped, tag = 'output window, operand 0, single buffered']
    %6 = vsyncpa [#allocation3], 0
    %7 = vsyncpa [#allocation4], 0
    // Predicated region
    $region2: #{tpu_custom_call.1} parent=1 // pred_check
      _
    $region3: #{tpu_custom_call.1} parent=1 // pred_check_branch
      %9 = sbr.rel (0) target = $region5
    $region4: #{tpu_custom_call.1} parent=1 // pred_region
      %11 = vsyncadd [#allocation3], 0
      %s12 = sshll.u32 %s0, 4
      %s13 = int_to_ptr.hbm [resolvable:$true] %s12
      %s14 = sshll.u32 [#allocation2], 4
      %s15 = int_to_ptr.vmem [resolvable:$true] %s14
      %20 = dma.hbm_to_vmem [thread:$0]  %s13, 64, %s15, [#allocation3], 32, 32, 2
    $region5: #{tpu_custom_call.1} parent=1 // pred_fallthru
      _
    // Predicated region
    $region6: #{tpu_custom_call.1} parent=1 // pred_check
      _
    $region7: #{tpu_custom_call.1} parent=1 // pred_check_branch
      %22 = sbr.rel (0) target = $region9
    $region8: #{tpu_custom_call.1} parent=1 // pred_region
      %24 = dma.done [#allocation3], 64
    $region9: #{tpu_custom_call.1} parent=1 // pred_fallthru
      _
    %v25 = vld [vmem:[#allocation2] sm:$0x3]
    %v26 = vld [vmem:[#allocation2 + $0x2] sm:$0x1]
    %v27 = vunpack.c.0.s8 %v25
    %v28 = vunpack.c.0.s8 %v26
    %v29 = vand.u32 %v27, 255
    %v30 = vand.u32 %v28, 255
    %v31 = vand.u32 %v29, 224
    %v32 = vand.u32 %v30, 224
    %v33 = vpack.c.b16 %v31, %v31
    %v34 = vpack.c.b8 %v33, %v33
    %v35 = vpack.c.b16 %v32, %v32
    %v36 = vpack.c.b8 %v35, %v35
    %37 = vst [vmem:[#allocation5] sm:$0x3] %v34
    %38 = vst [vmem:[#allocation5 + $0x2] sm:$0x1] %v36
    // Predicated region
    $region10: #{tpu_custom_call.1} parent=1 // pred_check
      _
    $region11: #{tpu_custom_call.1} parent=1 // pred_check_branch
      %40 = sbr.rel (0) target = $region13
    $region12: #{tpu_custom_call.1} parent=1 // pred_region
      %42 = vsyncadd [#allocation4], 0
      %s43 = sshll.u32 [#allocation5], 4
      %s44 = int_to_ptr.vmem [resolvable:$true] %s43
      %s45 = sshll.u32 %s1, 4
      %s46 = int_to_ptr.hbm [resolvable:$true] %s45
      %51 = dma.vmem_to_hbm [thread:$0]  %s44, 64, %s46, [#allocation4], 32, 32, 2
    $region13: #{tpu_custom_call.1} parent=1 // pred_fallthru
      _
    // Predicated region
    $region14: #{tpu_custom_call.1} parent=1 // pred_check
      _
    $region15: #{tpu_custom_call.1} parent=1 // pred_check_branch
      %53 = sbr.rel (0) target = $region17
    $region16: #{tpu_custom_call.1} parent=1 // pred_region
      %55 = dma.done [#allocation4], 64
    $region17: #{tpu_custom_call.1} parent=1 // pred_fallthru
      _
    %56 = vsyncpa [#allocation3], 1
    %57 = vsyncpa [#allocation4], 1

</llo_original>
